<compile_context>
chip_gen: v7x
topology: tpu7x:2x2x1
jax: 0.10.0
libtpu: 0.0.40
codegen_flags: <defaults>
</compile_context>

<pallas_src>
import functools
import math

import jax
import jax.numpy as jnp
from jax import lax
from jax.experimental import pallas as pl
from jax.experimental.pallas import tpu as pltpu


# ----------------------------------------------------------------------------
# helpers
# ----------------------------------------------------------------------------
def _pick_tile(dim, target, align):
    """Largest `align`-multiple divisor of `dim` <= target, else the full dim."""
    if dim <= target:
        return dim
    t = (target // align) * align
    while t >= align:
        if dim % t == 0:
            return t
        t -= align
    return dim  # fallback: whole dim (always a legal block)


_VMEM_LIMIT = 48 * 1024 * 1024  # fits v7x (64 MiB phys) and v5e/v6e (128 MiB)


# ----------------------------------------------------------------------------
# tiled linear:  out[M, N] = x[M, K] @ w[N, K]^T   (w in PyTorch (out,in) layout)
# ----------------------------------------------------------------------------
def _linear_kernel(x_ref, w_ref, o_ref, acc_ref):
    @pl.when(pl.program_id(2) == 0)
    def _init():
        acc_ref[...] = jnp.zeros(acc_ref.shape, acc_ref.dtype)

    xb = x_ref[...].astype(jnp.bfloat16)
    wb = w_ref[...].astype(jnp.bfloat16)
    acc_ref[...] += lax.dot_general(
        xb, wb, (((1,), (1,)), ((), ())), preferred_element_type=jnp.float32)

    @pl.when(pl.program_id(2) == pl.num_programs(2) - 1)
    def _finalize():
        o_ref[...] = acc_ref[...].astype(o_ref.dtype)


def _linear(x2d, w):
    """x2d: (M, K) f32, w: (N, K) f32 (PyTorch (out, in)).  Returns (M, N) f32."""
    M, K = x2d.shape
    N, K2 = w.shape
    assert K == K2
    tm = _pick_tile(M, 256, 8)
    tn = _pick_tile(N, 256, 128)
    tk = _pick_tile(K, 512, 128)
    grid = (M // tm, N // tn, K // tk)
    return pl.pallas_call(
        _linear_kernel,
        out_shape=jax.ShapeDtypeStruct((M, N), jnp.float32),
        grid=grid,
        in_specs=[
            pl.BlockSpec((tm, tk), lambda i, j, k: (i, k)),
            pl.BlockSpec((tn, tk), lambda i, j, k: (j, k)),
        ],
        out_specs=pl.BlockSpec((tm, tn), lambda i, j, k: (i, j)),
        scratch_shapes=[pltpu.VMEM((tm, tn), jnp.float32)],
        compiler_params=pltpu.CompilerParams(
            dimension_semantics=("parallel", "parallel", "arbitrary"),
            vmem_limit_bytes=_VMEM_LIMIT),
    )(x2d, w)


# ----------------------------------------------------------------------------
# flash attention with fused rotary (half-split layout), all heads per block
# ----------------------------------------------------------------------------
def _attn_kernel(q_ref, k_ref, v_ref, cq_ref, sq_ref, ck_ref, sk_ref, *rest,
                 causal, has_bias):
    if has_bias:
        bias_ref, o_ref, m_sc, l_sc, acc_sc = rest
    else:
        bias_ref = None
        o_ref, m_sc, l_sc, acc_sc = rest

    qi = pl.program_id(1)
    ki = pl.program_id(2)
    tq, H, D = q_ref.shape
    tk = k_ref.shape[0]
    half = D // 2

    @pl.when(ki == 0)
    def _init():
        m_sc[...] = jnp.full(m_sc.shape, -jnp.inf, m_sc.dtype)
        l_sc[...] = jnp.zeros(l_sc.shape, l_sc.dtype)
        acc_sc[...] = jnp.zeros(acc_sc.shape, acc_sc.dtype)

    def _rotate(x, cos, sin):
        # x: (T, H, D) in half-split (even | odd) layout; cos/sin: (T, D)
        x1 = x[..., :half]
        x2 = x[..., half:]
        xr = jnp.concatenate([-x2, x1], axis=-1)
        return x * cos[:, None, :] + xr * sin[:, None, :]

    def _compute():
        # rotary in f32, cast only MXU operands to bf16 (scale folded into cq/sq)
        qr = _rotate(q_ref[...], cq_ref[...], sq_ref[...]).astype(jnp.bfloat16)
        kr = _rotate(k_ref[...], ck_ref[...], sk_ref[...]).astype(jnp.bfloat16)

        # one full-head_dim MXU contraction, batched over heads: (H, tq, tk)
        s = jnp.einsum("qhd,khd->hqk", qr, kr,
                       preferred_element_type=jnp.float32)
        if has_bias:
            s = s + bias_ref[...][None, :, :]
        if causal:
            qpos = qi * tq + lax.broadcasted_iota(jnp.int32, (tq, tk), 0)
            kpos = ki * tk + lax.broadcasted_iota(jnp.int32, (tq, tk), 1)
            s = jnp.where((qpos >= kpos)[None, :, :], s, -1e30)

        m_prev = m_sc[...]                                     # (H, tq, 1)
        m_new = jnp.maximum(m_prev, jnp.max(s, axis=-1, keepdims=True))
        alpha = jnp.exp(m_prev - m_new)
        p = jnp.exp(s - m_new)                                 # (H, tq, tk)
        l_sc[...] = alpha * l_sc[...] + jnp.sum(p, axis=-1, keepdims=True)
        pv = jnp.einsum("hqk,khd->hqd",
                        p.astype(jnp.bfloat16),
                        v_ref[...].astype(jnp.bfloat16),
                        preferred_element_type=jnp.float32)    # (H, tq, D)
        acc_sc[...] = alpha * acc_sc[...] + pv
        m_sc[...] = m_new

    if causal:
        # skip KV blocks that are fully above the diagonal for this q tile
        @pl.when(ki * tk <= qi * tq + (tq - 1))
        def _run():
            _compute()
    else:
        _compute()

    @pl.when(ki == pl.num_programs(2) - 1)
    def _finalize():
        inv_l = pl.reciprocal(l_sc[...], approx=True)          # EUP, ~free
        o = acc_sc[...] * inv_l                                # (H, tq, D)
        for h in range(H):                                     # static unroll
            o_ref[:, h, :] = o[h].astype(o_ref.dtype)


def _flash_attention(qkv5, cos, sin, scale, *, causal, bias=None,
                     q_tile=128, kv_tile=128):
    """qkv5: (B, S, 3, H, D) f32; cos/sin: (S, D); bias: optional (S, S) additive."""
    B, S, three, H, D = qkv5.shape
    assert three == 3
    tq = _pick_tile(S, q_tile, 8)
    tk = _pick_tile(S, kv_tile, 128 if bias is not None else 8)
    grid = (B, S // tq, S // tk)

    cos_q = cos * scale    # fold 1/sqrt(D) into the q-side rotary tables
    sin_q = sin * scale

    q_spec = pl.BlockSpec((None, tq, None, H, D), lambda b, i, j: (b, i, 0, 0, 0))
    k_spec = pl.BlockSpec((None, tk, None, H, D), lambda b, i, j: (b, j, 1, 0, 0))
    v_spec = pl.BlockSpec((None, tk, None, H, D), lambda b, i, j: (b, j, 2, 0, 0))
    cq_spec = pl.BlockSpec((tq, D), lambda b, i, j: (i, 0))
    ck_spec = pl.BlockSpec((tk, D), lambda b, i, j: (j, 0))

    in_specs = [q_spec, k_spec, v_spec, cq_spec, cq_spec, ck_spec, ck_spec]
    args = [qkv5, qkv5, qkv5, cos_q, sin_q, cos, sin]
    if bias is not None:
        in_specs.append(pl.BlockSpec((tq, tk), lambda b, i, j: (i, j)))
        args.append(bias)

    kernel = functools.partial(_attn_kernel, causal=causal,
                               has_bias=bias is not None)
    return pl.pallas_call(
        kernel,
        out_shape=jax.ShapeDtypeStruct((B, S, H, D), jnp.float32),
        grid=grid,
        in_specs=in_specs,
        out_specs=pl.BlockSpec((None, tq, H, D), lambda b, i, j: (b, i, 0, 0)),
        scratch_shapes=[
            pltpu.VMEM((H, tq, 1), jnp.float32),   # m
            pltpu.VMEM((H, tq, 1), jnp.float32),   # l
            pltpu.VMEM((H, tq, D), jnp.float32),   # acc
        ],
        compiler_params=pltpu.CompilerParams(
            dimension_semantics=("parallel", "parallel", "arbitrary"),
            vmem_limit_bytes=_VMEM_LIMIT),
    )(*args)


# ----------------------------------------------------------------------------
# forward pass
# ----------------------------------------------------------------------------
def multi_head_rot_forward(x, w_qkv, w_out, nhead, src_mask=None,
                           src_padding=None, is_causal=True):
    """x: (B, S, E); w_qkv: (3E, E); w_out: (E, E)  (PyTorch (out, in) layout)."""
    del src_padding  # unused by the reference module
    B, S, E = x.shape
    H = nhead
    D = E // H
    assert D % 2 == 0

    # Permute the q/k output features of w_qkv into half-split (even | odd)
    # rotary layout at trace time — zero in-kernel cost; q.k^T is invariant
    # under the shared permutation and v is untouched.
    d_idx = jnp.arange(D)
    half_split = jnp.concatenate([d_idx[0::2], d_idx[1::2]])
    rows = []
    for part in range(3):
        perm_d = half_split if part < 2 else d_idx
        for h in range(H):
            rows.append(part * E + h * D + perm_d)
    perm = jnp.concatenate(rows)
    w_qkv_perm = w_qkv[perm, :]                       # (3E, E), (out, in)

    # fused QKV projection (tiled, K-accumulated, bf16 MXU operands)
    qkv = _linear(x.reshape(B * S, E), w_qkv_perm)    # (B*S, 3E) f32
    qkv5 = qkv.reshape(B, S, 3, H, D)                 # free reshape, no copies

    # rotary tables (lucidrains RotaryEmbedding defaults: theta=10000,
    # positions 0..S-1), duplicated across the two half-split halves
    inv_freq = 1.0 / (10000.0 ** (jnp.arange(0, D, 2, dtype=jnp.float32) / D))
    angles = jnp.outer(jnp.arange(S, dtype=jnp.float32), inv_freq)   # (S, D//2)
    cos = jnp.concatenate([jnp.cos(angles)] * 2, axis=-1)            # (S, D)
    sin = jnp.concatenate([jnp.sin(angles)] * 2, axis=-1)            # (S, D)

    bias = None
    if (not is_causal) and (src_mask is not None):
        bias = src_mask.astype(jnp.float32)           # additive (S, S) mask

    o = _flash_attention(qkv5, cos, sin, 1.0 / math.sqrt(D),
                         causal=is_causal, bias=bias)  # (B, S, H, D)

    # head merge is a free reshape (no transpose), then the output projection
    out = _linear(o.reshape(B * S, E), w_out)
    return out.reshape(B, S, E)


# ----------------------------------------------------------------------------
# pure-JAX reference (for the correctness check in the demo)
# ----------------------------------------------------------------------------
def _reference_forward(x, w_qkv, w_out, nhead, is_causal=True):
    B, S, E = x.shape
    H = nhead
    D = E // H
    qkv = x @ w_qkv.T
    q, k, v = jnp.split(qkv, 3, axis=-1)

    def heads(t):
        return t.reshape(B, S, H, D).transpose(0, 2, 1, 3)

    q, k, v = heads(q), heads(k), heads(v)
    inv_freq = 1.0 / (10000.0 ** (jnp.arange(0, D, 2, dtype=jnp.float32) / D))
    ang = jnp.outer(jnp.arange(S, dtype=jnp.float32), inv_freq)
    cos = jnp.repeat(jnp.cos(ang), 2, axis=-1)
    sin = jnp.repeat(jnp.sin(ang), 2, axis=-1)

    def rot(t):  # interleaved GPT-J style rotation
        t1 = t[..., 0::2]
        t2 = t[..., 1::2]
        tr = jnp.stack([-t2, t1], axis=-1).reshape(t.shape)
        return t * cos + tr * sin

    q, k = rot(q), rot(k)
    s = jnp.einsum("bhqd,bhkd->bhqk", q, k) / math.sqrt(D)
    if is_causal:
        s = jnp.where(jnp.tril(jnp.ones((S, S), dtype=bool)), s, -jnp.inf)
    p = jax.nn.softmax(s, axis=-1)
    o = jnp.einsum("bhqk,bhkd->bhqd", p, v)
    o = o.transpose(0, 2, 1, 3).reshape(B, S, E)
    return o @ w_out.T


# ----------------------------------------------------------------------------
# Demo
# ----------------------------------------------------------------------------
if __name__ == "__main__":
    B, S, d_model, nhead = 2, 8, 32, 4

    key = jax.random.PRNGKey(0)
    kx, kq, ko = jax.random.split(key, 3)

    x = jax.random.normal(kx, (B, S, d_model), dtype=jnp.float32)

    # PyTorch-style uniform init, weights in (out_features, in_features), bias=False
    bound = 1.0 / math.sqrt(d_model)
    w_qkv = jax.random.uniform(kq, (3 * d_model, d_model), jnp.float32,
                               minval=-bound, maxval=bound)
    w_out = jax.random.uniform(ko, (d_model, d_model), jnp.float32,
                               minval=-bound, maxval=bound)

    out = multi_head_rot_forward(x, w_qkv, w_out, nhead, src_mask=None,
                                 src_padding=None, is_causal=True)
    out = jax.block_until_ready(out)
    assert out.shape == (B, S, d_model)

    ref = _reference_forward(x, w_qkv, w_out, nhead, is_causal=True)
    err = float(jnp.max(jnp.abs(out - ref)))
    assert err < 1e-1, f"max abs error vs reference too large: {err}"
    print("KERNEL_OK")
</pallas_src>

<mosaic_0001>
module attributes {stable_mosaic.version = 11 : i64} {
  func.func @_linear_kernel(%arg0: i32, %arg1: i32, %arg2: i32, %arg3: memref<16x32xf32, #tpu.memory_space<vmem>>, %arg4: memref<96x32xf32, #tpu.memory_space<vmem>>, %arg5: memref<16x96xf32, #tpu.memory_space<vmem>>, %arg6: memref<16x96xf32, #tpu.memory_space<vmem>>) attributes {dimension_semantics = [#tpu.dimension_semantics<parallel>, #tpu.dimension_semantics<parallel>, #tpu.dimension_semantics<arbitrary>], iteration_bounds = array<i64: 1, 1, 1>, scalar_prefetch = 0 : i64, scratch_operands = 1 : i64, tpu.core_type = #tpu.core_type<tc>, window_params = [{transform_indices = @transform_0, window_bounds = array<i64: 16, 32>}, {transform_indices = @transform_1, window_bounds = array<i64: 96, 32>}, {transform_indices = @transform_2, window_bounds = array<i64: 16, 96>}]} {
    %c0_i32 = arith.constant 0 : i32
    %0 = arith.cmpi eq, %arg2, %c0_i32 : i32
    %1 = arith.extui %0 : i1 to i32
    %c0_i32_0 = arith.constant 0 : i32
    %2 = arith.cmpi ne, %1, %c0_i32_0 : i32
    scf.if %2 {
      %cst_10 = arith.constant 0.000000e+00 : f32
      %14 = vector.broadcast %cst_10 : f32 to vector<16x96xf32>
      %c0_11 = arith.constant 0 : index
      %c0_12 = arith.constant 0 : index
      %15 = vector.load %arg6[%c0_11, %c0_12] : memref<16x96xf32, #tpu.memory_space<vmem>>, vector<16x96xf32>
      tpu.vector_store %arg6[%c0_11, %c0_12], %14 {strides = array<i32>} : memref<16x96xf32, #tpu.memory_space<vmem>>, vector<16x96xf32>,
    } else {
    }
    %c0 = arith.constant 0 : index
    %c0_1 = arith.constant 0 : index
    %3 = vector.load %arg3[%c0, %c0_1] : memref<16x32xf32, #tpu.memory_space<vmem>>, vector<16x32xf32>
    %4 = arith.truncf %3 : vector<16x32xf32> to vector<16x32xbf16>
    %c0_2 = arith.constant 0 : index
    %c0_3 = arith.constant 0 : index
    %5 = vector.load %arg4[%c0_2, %c0_3] : memref<96x32xf32, #tpu.memory_space<vmem>>, vector<96x32xf32>
    %6 = arith.truncf %5 : vector<96x32xf32> to vector<96x32xbf16>
    %c0_4 = arith.constant 0 : index
    %c0_5 = arith.constant 0 : index
    %7 = vector.load %arg6[%c0_4, %c0_5] : memref<16x96xf32, #tpu.memory_space<vmem>>, vector<16x96xf32>
    %cst = arith.constant dense<0.000000e+00> : vector<16x96xf32>
    %8 = tpu.matmul %4, %6, %cst {dimension_numbers = #tpu.dot_dimension_numbers<[1], [1], [0], [0], [0, 0, 1, 0], [], []>} : vector<16x32xbf16>, vector<96x32xbf16>, vector<16x96xf32> -> vector<16x96xf32>
    %9 = arith.addf %7, %8 : vector<16x96xf32>
    %c0_6 = arith.constant 0 : index
    %c0_7 = arith.constant 0 : index
    %10 = vector.load %arg6[%c0_6, %c0_7] : memref<16x96xf32, #tpu.memory_space<vmem>>, vector<16x96xf32>
    tpu.vector_store %arg6[%c0_6, %c0_7], %9 {strides = array<i32>} : memref<16x96xf32, #tpu.memory_space<vmem>>, vector<16x96xf32>,
    %c0_i32_8 = arith.constant 0 : i32
    %11 = arith.cmpi eq, %arg2, %c0_i32_8 : i32
    %12 = arith.extui %11 : i1 to i32
    %c0_i32_9 = arith.constant 0 : i32
    %13 = arith.cmpi ne, %12, %c0_i32_9 : i32
    scf.if %13 {
      %c0_10 = arith.constant 0 : index
      %c0_11 = arith.constant 0 : index
      %14 = vector.load %arg6[%c0_10, %c0_11] : memref<16x96xf32, #tpu.memory_space<vmem>>, vector<16x96xf32>
      %c0_12 = arith.constant 0 : index
      %c0_13 = arith.constant 0 : index
      %15 = vector.load %arg5[%c0_12, %c0_13] : memref<16x96xf32, #tpu.memory_space<vmem>>, vector<16x96xf32>
      tpu.vector_store %arg5[%c0_12, %c0_13], %14 {strides = array<i32>} : memref<16x96xf32, #tpu.memory_space<vmem>>, vector<16x96xf32>,
    } else {
    }
    return
  }
  func.func @transform_0(%arg0: i32, %arg1: i32, %arg2: i32) -> (i32, i32) {
    %c0_i32 = arith.constant 0 : i32
    return %arg0, %arg2 : i32, i32
  }
  func.func @transform_1(%arg0: i32, %arg1: i32, %arg2: i32) -> (i32, i32) {
    %c0_i32 = arith.constant 0 : i32
    return %arg1, %arg2 : i32, i32
  }
  func.func @transform_2(%arg0: i32, %arg1: i32, %arg2: i32) -> (i32, i32) {
    %c0_i32 = arith.constant 0 : i32
    return %arg0, %arg1 : i32, i32
  }
}

</mosaic_0001>

<llo_original>
// kernel: tpu_custom_call.1
$region0: #{tpu_custom_call.1}
  #allocation0 [shape = 'u32[]', space=smem, size = 0x4, offset = 0x4, fixed_abs, tag = 'smem constant byte address 0x4 - core index']
  #allocation1 [shape = 'u32[144,128]{1,0:T(1,128)}', space=vmem, size = 0x12000, scoped, tag = 'internal scratch']
  #allocation2 [shape = 'f32[16,96]{1,0:T(8,128)}', space=vmem, size = 0x2000, scoped, tag = 'scratch operand']
  %s0 = inlined_call_operand.vmem [shape: f32[16,32], index: 0, kind: input, shape index: {}]
  %s1 = inlined_call_operand.vmem [shape: f32[96,32], index: 1, kind: input, shape index: {}]
  %s2 = inlined_call_operand.hbm [shape: f32[16,96], index: 2, kind: output, shape index: {}]
  %s3 = sld [smem:[#allocation0]]
  $region26: #{tpu_custom_call.1} parent=0
    _
  %s5 = ssub.s32 1, %s3
  %s6 = scalar_select 0, %s5, %s3
  $region1: #{tpu_custom_call.1} parent=0
    #allocation3 [shape = 'u8[8192]{0}', space=vmem, size = 0x2000, scoped, tag = 'output window, operand 0, single buffered']
    #allocation4 [shape = 's32[1]{0}', space=sflag, size = 0x4, scoped, tag = 'scoped memory for tpu_custom_call.1']
    %7 = vsyncpa [#allocation4], 0
    // Predicated region
    $region2: #{tpu_custom_call.1} parent=1 // pred_check
      _
    $region3: #{tpu_custom_call.1} parent=1 // pred_check_branch
      %9 = sbr.rel (0) target = $region5
    $region4: #{tpu_custom_call.1} parent=1 // pred_region
      _
    $region5: #{tpu_custom_call.1} parent=1 // pred_fallthru
      _
    // Predicated region
    $region6: #{tpu_custom_call.1} parent=1 // pred_check
      _
    $region7: #{tpu_custom_call.1} parent=1 // pred_check_branch
      %11 = sbr.rel (0) target = $region9
    $region8: #{tpu_custom_call.1} parent=1 // pred_region
      _
    $region9: #{tpu_custom_call.1} parent=1 // pred_fallthru
      _
    %p13 = scmp.eq.s32.totalorder 0, 0
    // Predicated region
    $region10: #{tpu_custom_call.1} parent=1 // pred_check
      %p14 = pneg %p13
    $region11: #{tpu_custom_call.1} parent=1 // pred_check_branch
      %16 = sbr.rel (%p14) target = $region13
    $region12: #{tpu_custom_call.1} parent=1 // pred_region
      %vm17 = vcmask 785408
      %18 = vst.msk [vmem:[#allocation2] sm:$0xff] %vm17, 0.0
      %19 = vst.msk [vmem:[#allocation2 + $0x8] sm:$0xff] %vm17, 0.0
    $region13: #{tpu_custom_call.1} parent=1 // pred_fallthru
      _
    %v20 = vld [vmem:[%s0] sm:$0xff]
    %v21 = vld [vmem:[%s0 + $0x8] sm:$0xff]
    %v22 = vpack.c.bf16 %v21, %v20
    %v23 = vld [vmem:[%s1] sm:$0xff]
    %v24 = vld [vmem:[%s1 + $0x8] sm:$0xff]
    %v25 = vld [vmem:[%s1 + $0x10] sm:$0xff]
    %v26 = vld [vmem:[%s1 + $0x18] sm:$0xff]
    %v27 = vld [vmem:[%s1 + $0x20] sm:$0xff]
    %v28 = vld [vmem:[%s1 + $0x28] sm:$0xff]
    %v29 = vld [vmem:[%s1 + $0x30] sm:$0xff]
    %v30 = vld [vmem:[%s1 + $0x38] sm:$0xff]
    %v31 = vld [vmem:[%s1 + $0x40] sm:$0xff]
    %v32 = vld [vmem:[%s1 + $0x48] sm:$0xff]
    %v33 = vld [vmem:[%s1 + $0x50] sm:$0xff]
    %v34 = vld [vmem:[%s1 + $0x58] sm:$0xff]
    %v35 = vpack.c.bf16 %v24, %v23
    %v36 = vpack.c.bf16 %v26, %v25
    %v37 = vpack.c.bf16 %v28, %v27
    %v38 = vpack.c.bf16 %v30, %v29
    %v39 = vpack.c.bf16 %v32, %v31
    %v40 = vpack.c.bf16 %v34, %v33
    %v41 = vld [vmem:[#allocation2] sm:$0xff]
    %v42 = vld [vmem:[#allocation2 + $0x8] sm:$0xff]
    %vm43 = vcmask 261120
    %v45 = vsel %vm43, %v22, 0
    %v48 = vsel %vm43, %v35, 0
    %v51 = vsel %vm43, %v36, 0
    %v54 = vsel %vm43, %v37, 0
    %v57 = vsel %vm43, %v38, 0
    %v60 = vsel %vm43, %v39, 0
    %v63 = vsel %vm43, %v40, 0
    %65 = vmatprep.subr.bf16.mxu0 0
    %66 = vmatpush1.bf16.xpose.msra.mxu0 %v48
    %67 = vmatprep.subr.bf16.mxu0 0
    %68 = vmatpush1.bf16.xpose.msra.mxu0 %v51
    %69 = vmatprep.subr.bf16.mxu0 0
    %70 = vmatpush1.bf16.xpose.msra.mxu0 %v54
    %71 = vmatprep.subr.bf16.mxu0 0
    %72 = vmatpush1.bf16.xpose.msra.mxu0 %v57
    %73 = vmatprep.subr.bf16.mxu0 0
    %74 = vmatpush1.bf16.xpose.msra.mxu0 %v60
    %75 = vmatprep.subr.bf16.mxu0 0
    %76 = vmatpush1.bf16.xpose.msra.mxu0 %v63
    %77 = vmatprep.subr.bf16.mxu0 0
    %78 = vmatpush1.bf16.xpose.msra.mxu0 0
    %79 = vmatprep.subr.bf16.mxu0 0
    %80 = vmatpush1.bf16.xpose.msra.mxu0 0
    %81 = vmatprep.subr.bf16.mxu0 0
    %82 = vmatpush1.bf16.xpose.msra.mxu0 0
    %83 = vmatprep.subr.bf16.mxu0 0
    %84 = vmatpush1.bf16.xpose.msra.mxu0 0
    %85 = vmatprep.subr.bf16.mxu0 0
    %86 = vmatpush1.bf16.xpose.msra.mxu0 0
    %87 = vmatprep.subr.bf16.mxu0 0
    %88 = vmatpush1.bf16.xpose.msra.mxu0 0
    %89 = vmatprep.subr.bf16.mxu0 0
    %90 = vmatpush1.bf16.xpose.msra.mxu0 0
    %91 = vmatprep.subr.bf16.mxu0 0
    %92 = vmatpush1.bf16.xpose.msra.mxu0 0
    %93 = vmatprep.subr.bf16.mxu0 0
    %94 = vmatpush1.bf16.xpose.msra.mxu0 0
    %95 = vmatprep.subr.bf16.mxu0 0
    %96 = vmatpush1.bf16.xpose.msra.mxu0 0
    %97 = vmatprep.mubr.bf16.mxu0 0
    %98 = vmatmul.mubr.bf16.gmra.mrb[0].mxu0 %v45
    %v99 = vpop.f32.mrb[0].mxu0
    %v100 = vadd.f32 0.0, %v99
    %v101 = vpop.f32.mrb[0].mxu0
    %v102 = vpop.f32.mrb[0].mxu0
    %v103 = vadd.f32 0.0, %v102
    %v104 = vpop.f32.mrb[0].mxu0
    %105 = vdwg.mxu0
    %v106 = vadd.f32 %v41, %v100
    %v107 = vadd.f32 %v42, %v103
    %vm108 = vcmask 785408
    %109 = vst.msk [vmem:[#allocation2] sm:$0xff] %vm108, %v106
    %110 = vst.msk [vmem:[#allocation2 + $0x8] sm:$0xff] %vm108, %v107
    // Predicated region
    $region14: #{tpu_custom_call.1} parent=1 // pred_check
      %p111 = pneg %p13
    $region15: #{tpu_custom_call.1} parent=1 // pred_check_branch
      %113 = sbr.rel (%p111) target = $region17
    $region16: #{tpu_custom_call.1} parent=1 // pred_region
      %v114 = vld [vmem:[#allocation2] sm:$0xff]
      %v115 = vld [vmem:[#allocation2 + $0x8] sm:$0xff]
      %116 = vst.msk [vmem:[#allocation3] sm:$0xff] %vm108, %v114
      %117 = vst.msk [vmem:[#allocation3 + $0x8] sm:$0xff] %vm108, %v115
    $region17: #{tpu_custom_call.1} parent=1 // pred_fallthru
      _
    // Predicated region
    $region18: #{tpu_custom_call.1} parent=1 // pred_check
      _
    $region19: #{tpu_custom_call.1} parent=1 // pred_check_branch
      %119 = sbr.rel (0) target = $region21
    $region20: #{tpu_custom_call.1} parent=1 // pred_region
      %s121 = ssub.s32 256, 256
      %122 = vsyncadd [#allocation4], %s121
      %s123 = sshll.u32 [#allocation3], 4
      %s124 = int_to_ptr.vmem [resolvable:$true] %s123
      %129 = dma.vmem_to_hbm [thread:$0]  %s124, 256, %s2, [#allocation4], 128, 128, 8
    $region21: #{tpu_custom_call.1} parent=1 // pred_fallthru
      _
    // Predicated region
    $region22: #{tpu_custom_call.1} parent=1 // pred_check
      _
    $region23: #{tpu_custom_call.1} parent=1 // pred_check_branch
      %131 = sbr.rel (0) target = $region25
    $region24: #{tpu_custom_call.1} parent=1 // pred_region
      %132 = dma.done [#allocation4], 256
    $region25: #{tpu_custom_call.1} parent=1 // pred_fallthru
      _
    %133 = vsyncpa [#allocation4], 1

</llo_original>
